<compile_context>
chip_gen: v7x
topology: tpu7x:2x2x1
jax: 0.10.0
libtpu: 0.0.40
codegen_flags: <defaults>
</compile_context>

<pallas_src>
import functools

import jax
import jax.numpy as jnp
from jax.experimental import pallas as pl
from jax.experimental.pallas import tpu as pltpu


def _fused_matmul_kernel(x_ref, w_ref, b_ref, o_ref):
    # Conv1d already folded into w/b in the wrapper: one MXU matmul + bias.
    o_ref[...] = (
        jnp.dot(x_ref[...], w_ref[...], preferred_element_type=jnp.float32)
        + b_ref[...]
    ).astype(o_ref.dtype)


def _round_up(x, m):
    return ((x + m - 1) // m) * m


@functools.partial(jax.jit, static_argnames=("tile_n",))
def relfeat_merge_extractor(x_i, x_j, geo_feats,
                            w_obj, b_obj, w_geo, b_geo,
                            conv_w, conv_b, *, tile_n=1024):
    n = x_i.shape[0]
    dim_out = w_obj.shape[0]
    cw = conv_w.reshape(3, 5).astype(jnp.float32)

    # ---- Fold Conv1d into the projection weights (pure XLA, one-time cost) ----
    # Reference: out[n, d] = conv_b + sum_c sum_k cw[c, k] * p_c[n, d + k - 2]
    #                      = conv_b + sum_c sum_{d'} p_c[n, d'] * cw[c, d' - d + 2]
    # => banded Toeplitz T_c[d', d] = cw[c, d' - d + 2] for 0 <= d' - d + 2 <= 4.
    d_src = jnp.arange(dim_out)[:, None]
    d_dst = jnp.arange(dim_out)[None, :]
    k_idx = d_src - d_dst + 2
    valid = (k_idx >= 0) & (k_idx <= 4)
    T = jnp.where(valid[None, :, :], cw[:, jnp.clip(k_idx, 0, 4)], 0.0)  # (3, D, D)

    # Folded weights already transposed to (in_feats, out_feats): kernel does x @ W.
    w_i = w_obj.T @ T[0]
    w_j = w_obj.T @ T[1]
    w_g = w_geo.T @ T[2]
    w_all = jnp.concatenate([w_i, w_j, w_g], axis=0).astype(jnp.float32)   # (Ktot, D)
    b_all = (conv_b[0] + b_obj @ T[0] + b_obj @ T[1] + b_geo @ T[2])
    b_all = b_all.reshape(1, dim_out).astype(jnp.float32)                  # (1, D)

    # Single concatenated input -> one matmul per row tile.
    x_all = jnp.concatenate([x_i, x_j, geo_feats], axis=-1).astype(jnp.float32)
    k_tot = x_all.shape[1]

    # Row tile: large for HBM roofline, clamped to the (padded) edge count.
    tile_n = min(tile_n, _round_up(max(n, 1), 8))
    grid = (pl.cdiv(n, tile_n),)

    # TODO(synk): dim_out < 128 means output stores are masked (vst.msk); a
    # lane-dense (padded-to-128) output layout would help if the caller allows.
    return pl.pallas_call(
        _fused_matmul_kernel,
        out_shape=jax.ShapeDtypeStruct((n, dim_out), jnp.float32),
        grid=grid,
        in_specs=[
            pl.BlockSpec((tile_n, k_tot), lambda i: (i, 0)),    # row-tiled inputs
            pl.BlockSpec((k_tot, dim_out), lambda i: (0, 0)),   # folded weights
            pl.BlockSpec((1, dim_out), lambda i: (0, 0)),       # fused bias
        ],
        out_specs=pl.BlockSpec((tile_n, dim_out), lambda i: (i, 0)),
        compiler_params=pltpu.CompilerParams(
            dimension_semantics=("parallel",),
        ),
    )(x_all, w_all, b_all)


def reference(x_i, x_j, geo_feats, w_obj, b_obj, w_geo, b_geo, conv_w, conv_b):
    """Pure-JAX reference matching the PyTorch module."""
    p_i = x_i @ w_obj.T + b_obj
    p_j = x_j @ w_obj.T + b_obj
    g = geo_feats @ w_geo.T + b_geo
    m = jnp.stack([p_i, p_j, g], axis=1)                     # (N, 3, D)
    m_pad = jnp.pad(m, ((0, 0), (0, 0), (2, 2)))
    dim_out = w_obj.shape[0]
    out = jnp.zeros((x_i.shape[0], dim_out), jnp.float32) + conv_b[0]
    for c in range(3):
        for k in range(5):
            out = out + conv_w[0, c, k] * m_pad[:, c, k:k + dim_out]
    return out


if __name__ == "__main__":
    key = jax.random.PRNGKey(0)
    dim_obj_feats = 32
    dim_geo_feats = 8
    dim_out_feats = 32

    ks = jax.random.split(key, 9)
    # Deterministic synthetic parameters (shapes match nn.Linear / nn.Conv1d).
    w_obj = 0.1 * jax.random.normal(ks[3], (dim_out_feats, dim_obj_feats), jnp.float32)
    b_obj = 0.1 * jax.random.normal(ks[4], (dim_out_feats,), jnp.float32)
    w_geo = 0.1 * jax.random.normal(ks[5], (dim_out_feats, dim_geo_feats), jnp.float32)
    b_geo = 0.1 * jax.random.normal(ks[6], (dim_out_feats,), jnp.float32)
    conv_w = 0.1 * jax.random.normal(ks[7], (1, 3, 5), jnp.float32)
    conv_b = 0.1 * jax.random.normal(ks[8], (1,), jnp.float32)

    ok = True

    # Small demo shapes (N = number of edge pairs).
    N = 16
    x_i = jax.random.normal(ks[0], (N, dim_obj_feats), jnp.float32)
    x_j = jax.random.normal(ks[1], (N, dim_obj_feats), jnp.float32)
    geo = jax.random.normal(ks[2], (N, dim_geo_feats), jnp.float32)

    out = relfeat_merge_extractor(x_i, x_j, geo,
                                  w_obj, b_obj, w_geo, b_geo,
                                  conv_w, conv_b)
    out = jax.block_until_ready(out)
    ref = reference(x_i, x_j, geo, w_obj, b_obj, w_geo, b_geo, conv_w, conv_b)
    ok &= out.shape == (N, dim_out_feats)
    ok &= bool(jnp.allclose(out, ref, atol=1e-4, rtol=1e-4))

    # Exercise the multi-block grid with a partial last tile.
    N2 = 300
    kx = jax.random.split(ks[0], 3)
    x_i2 = jax.random.normal(kx[0], (N2, dim_obj_feats), jnp.float32)
    x_j2 = jax.random.normal(kx[1], (N2, dim_obj_feats), jnp.float32)
    geo2 = jax.random.normal(kx[2], (N2, dim_geo_feats), jnp.float32)

    out2 = relfeat_merge_extractor(x_i2, x_j2, geo2,
                                   w_obj, b_obj, w_geo, b_geo,
                                   conv_w, conv_b, tile_n=128)
    out2 = jax.block_until_ready(out2)
    ref2 = reference(x_i2, x_j2, geo2, w_obj, b_obj, w_geo, b_geo, conv_w, conv_b)
    ok &= out2.shape == (N2, dim_out_feats)
    ok &= bool(jnp.allclose(out2, ref2, atol=1e-4, rtol=1e-4))

    assert ok
    print("KERNEL_OK")
</pallas_src>

<mosaic_0001>
module attributes {stable_mosaic.version = 11 : i64} {
  func.func @_fused_matmul_kernel(%arg0: i32, %arg1: memref<16x72xf32, #tpu.memory_space<vmem>>, %arg2: memref<72x32xf32, #tpu.memory_space<vmem>>, %arg3: memref<1x32xf32, #tpu.memory_space<vmem>>, %arg4: memref<16x32xf32, #tpu.memory_space<vmem>>) attributes {dimension_semantics = [#tpu.dimension_semantics<parallel>], iteration_bounds = array<i64: 1>, scalar_prefetch = 0 : i64, scratch_operands = 0 : i64, tpu.core_type = #tpu.core_type<tc>, window_params = [{transform_indices = @transform_0, window_bounds = array<i64: 16, 72>}, {pipeline_mode = #tpu.pipeline_mode<synchronous>, transform_indices = @transform_1, window_bounds = array<i64: 72, 32>}, {pipeline_mode = #tpu.pipeline_mode<synchronous>, transform_indices = @transform_2, window_bounds = array<i64: 1, 32>}, {transform_indices = @transform_3, window_bounds = array<i64: 16, 32>}]} {
    %c0 = arith.constant 0 : index
    %c0_0 = arith.constant 0 : index
    %0 = vector.load %arg1[%c0, %c0_0] : memref<16x72xf32, #tpu.memory_space<vmem>>, vector<16x72xf32>
    %c0_1 = arith.constant 0 : index
    %c0_2 = arith.constant 0 : index
    %1 = vector.load %arg2[%c0_1, %c0_2] : memref<72x32xf32, #tpu.memory_space<vmem>>, vector<72x32xf32>
    %cst = arith.constant dense<0.000000e+00> : vector<16x32xf32>
    %2 = tpu.matmul %0, %1, %cst {dimension_numbers = #tpu.dot_dimension_numbers<[1], [0], [0], [1], [0, 0, 1, 1], [], []>} : vector<16x72xf32>, vector<72x32xf32>, vector<16x32xf32> -> vector<16x32xf32>
    %c0_3 = arith.constant 0 : index
    %c0_4 = arith.constant 0 : index
    %3 = vector.load %arg3[%c0_3, %c0_4] : memref<1x32xf32, #tpu.memory_space<vmem>>, vector<1x32xf32>
    %4 = vector.broadcast %3 : vector<1x32xf32> to vector<16x32xf32>
    %5 = arith.addf %2, %4 : vector<16x32xf32>
    %c0_5 = arith.constant 0 : index
    %c0_6 = arith.constant 0 : index
    %6 = vector.load %arg4[%c0_5, %c0_6] : memref<16x32xf32, #tpu.memory_space<vmem>>, vector<16x32xf32>
    tpu.vector_store %arg4[%c0_5, %c0_6], %5 {strides = array<i32>} : memref<16x32xf32, #tpu.memory_space<vmem>>, vector<16x32xf32>,
    return
  }
  func.func @transform_0(%arg0: i32) -> (i32, i32) {
    %c0_i32 = arith.constant 0 : i32
    %c0_i32_0 = arith.constant 0 : i32
    return %arg0, %c0_i32 : i32, i32
  }
  func.func @transform_1(%arg0: i32) -> (i32, i32) {
    %c0_i32 = arith.constant 0 : i32
    %c0_i32_0 = arith.constant 0 : i32
    %c0_i32_1 = arith.constant 0 : i32
    return %c0_i32, %c0_i32_0 : i32, i32
  }
  func.func @transform_2(%arg0: i32) -> (i32, i32) {
    %c0_i32 = arith.constant 0 : i32
    %c0_i32_0 = arith.constant 0 : i32
    %c0_i32_1 = arith.constant 0 : i32
    return %c0_i32, %c0_i32_0 : i32, i32
  }
  func.func @transform_3(%arg0: i32) -> (i32, i32) {
    %c0_i32 = arith.constant 0 : i32
    %c0_i32_0 = arith.constant 0 : i32
    return %arg0, %c0_i32 : i32, i32
  }
}

</mosaic_0001>

<llo_original>
// kernel: relfeat_merge_extractor.1
$region0: #{relfeat_merge_extractor.1}
  #allocation0 [shape = 'u32[]', space=smem, size = 0x4, offset = 0x4, fixed_abs, tag = 'smem constant byte address 0x4 - core index']
  #allocation1 [shape = 'u32[144,128]{1,0:T(1,128)}', space=vmem, size = 0x12000, scoped, tag = 'internal scratch']
  %s0 = inlined_call_operand.vmem [shape: f32[16,72], index: 0, kind: input, shape index: {}]
  %s1 = inlined_call_operand.vmem [shape: f32[72,32], index: 1, kind: input, shape index: {}]
  %s2 = inlined_call_operand.vmem [shape: f32[1,32], index: 2, kind: input, shape index: {}]
  %s3 = inlined_call_operand.hbm [shape: f32[16,32], index: 3, kind: output, shape index: {}]
  %s4 = sld [smem:[#allocation0]]
  $region22: #{relfeat_merge_extractor.1} parent=0
    _
  %s6 = ssub.s32 1, %s4
  %s7 = scalar_select 0, %s6, %s4
  $region1: #{relfeat_merge_extractor.1} parent=0
    #allocation2 [shape = 'u8[8192]{0}', space=vmem, size = 0x2000, scoped, tag = 'output window, operand 0, single buffered']
    #allocation3 [shape = 's32[1]{0}', space=sflag, size = 0x4, scoped, tag = 'scoped memory for relfeat_merge_extractor.1']
    %8 = vsyncpa [#allocation3], 0
    // Predicated region
    $region2: #{relfeat_merge_extractor.1} parent=1 // pred_check
      _
    $region3: #{relfeat_merge_extractor.1} parent=1 // pred_check_branch
      %10 = sbr.rel (0) target = $region5
    $region4: #{relfeat_merge_extractor.1} parent=1 // pred_region
      _
    $region5: #{relfeat_merge_extractor.1} parent=1 // pred_fallthru
      _
    // Predicated region
    $region6: #{relfeat_merge_extractor.1} parent=1 // pred_check
      _
    $region7: #{relfeat_merge_extractor.1} parent=1 // pred_check_branch
      %12 = sbr.rel (0) target = $region9
    $region8: #{relfeat_merge_extractor.1} parent=1 // pred_region
      _
    $region9: #{relfeat_merge_extractor.1} parent=1 // pred_fallthru
      _
    // Predicated region
    $region10: #{relfeat_merge_extractor.1} parent=1 // pred_check
      _
    $region11: #{relfeat_merge_extractor.1} parent=1 // pred_check_branch
      %14 = sbr.rel (0) target = $region13
    $region12: #{relfeat_merge_extractor.1} parent=1 // pred_region
      _
    $region13: #{relfeat_merge_extractor.1} parent=1 // pred_fallthru
      _
    %v15 = vld [vmem:[%s0] sm:$0xff]
    %v16 = vld [vmem:[%s0 + $0x8] sm:$0xff]
    %v17 = vld [vmem:[%s1] sm:$0xff]
    %v18 = vld [vmem:[%s1 + $0x8] sm:$0xff]
    %v19 = vld [vmem:[%s1 + $0x10] sm:$0xff]
    %v20 = vld [vmem:[%s1 + $0x18] sm:$0xff]
    %v21 = vld [vmem:[%s1 + $0x20] sm:$0xff]
    %v22 = vld [vmem:[%s1 + $0x28] sm:$0xff]
    %v23 = vld [vmem:[%s1 + $0x30] sm:$0xff]
    %v24 = vld [vmem:[%s1 + $0x38] sm:$0xff]
    %v25 = vld [vmem:[%s1 + $0x40] sm:$0xff]
    %v26 = vld [vmem:[%s2] sm:$0x1]
    %v28 = vlaneseq
    %v29 = vshrl.u32 %v28, 7
    %v30 = vsub.s32 0, %v29
    %v31 = vrot.slane %v26, %v30
    %vm33 = vcmask 588800
    %v35 = vsel %vm33, %v15, 0
    %v38 = vsel %vm33, %v16, 0
    %40 = vmatprep.subr.mxu0 0.0
    %41 = vmatpush1.msra.mxu0 %v17
    %42 = vmatprep.subr.mxu0 0.0
    %43 = vmatpush1.msra.mxu0 %v18
    %44 = vmatprep.subr.mxu0 0.0
    %45 = vmatpush1.msra.mxu0 %v19
    %46 = vmatprep.subr.mxu0 0.0
    %47 = vmatpush1.msra.mxu0 %v20
    %48 = vmatprep.subr.mxu0 0.0
    %49 = vmatpush1.msra.mxu0 %v21
    %50 = vmatprep.subr.mxu0 0.0
    %51 = vmatpush1.msra.mxu0 %v22
    %52 = vmatprep.subr.mxu0 0.0
    %53 = vmatpush1.msra.mxu0 %v23
    %54 = vmatprep.subr.mxu0 0.0
    %55 = vmatpush1.msra.mxu0 %v24
    %56 = vmatprep.subr.mxu0 0.0
    %57 = vmatpush1.msra.mxu0 %v25
    %58 = vmatprep.subr.mxu0 0.0
    %59 = vmatpush1.msra.mxu0 0.0
    %60 = vmatprep.subr.mxu0 0.0
    %61 = vmatpush1.msra.mxu0 0.0
    %62 = vmatprep.subr.mxu0 0.0
    %63 = vmatpush1.msra.mxu0 0.0
    %64 = vmatprep.subr.mxu0 0.0
    %65 = vmatpush1.msra.mxu0 0.0
    %66 = vmatprep.subr.mxu0 0.0
    %67 = vmatpush1.msra.mxu0 0.0
    %68 = vmatprep.subr.mxu0 0.0
    %69 = vmatpush1.msra.mxu0 0.0
    %70 = vmatprep.subr.mxu0 0.0
    %71 = vmatpush1.msra.mxu0 0.0
    %72 = vmatprep.subr.mxu0 0.0
    %73 = vmatpush1.msra.mxu0 0.0
    %74 = vmatprep.subr.mxu0 0.0
    %75 = vmatpush1.msra.mxu0 0.0
    %76 = vmatprep.subr.mxu0 0.0
    %77 = vmatpush1.msra.mxu0 0.0
    %78 = vmatprep.subr.mxu0 0.0
    %79 = vmatpush1.msra.mxu0 0.0
    %80 = vmatprep.subr.mxu0 0.0
    %81 = vmatpush1.msra.mxu0 0.0
    %82 = vmatprep.subr.mxu0 0.0
    %83 = vmatpush1.msra.mxu0 0.0
    %84 = vmatprep.subr.mxu0 0.0
    %85 = vmatpush1.msra.mxu0 0.0
    %86 = vmatprep.subr.mxu0 0.0
    %87 = vmatpush1.msra.mxu0 0.0
    %88 = vmatprep.subr.mxu0 0.0
    %89 = vmatpush1.msra.mxu0 0.0
    %90 = vmatprep.subr.mxu0 0.0
    %91 = vmatpush1.msra.mxu0 0.0
    %92 = vmatprep.subr.mxu0 0.0
    %93 = vmatpush1.msra.mxu0 0.0
    %94 = vmatprep.subr.mxu0 0.0
    %95 = vmatpush1.msra.mxu0 0.0
    %96 = vmatprep.subr.mxu0 0.0
    %97 = vmatpush1.msra.mxu0 0.0
    %98 = vmatprep.subr.mxu0 0.0
    %99 = vmatpush1.msra.mxu0 0.0
    %100 = vmatprep.subr.mxu0 0.0
    %101 = vmatpush1.msra.mxu0 0.0
    %102 = vmatprep.subr.mxu0 0.0
    %103 = vmatpush1.msra.mxu0 0.0
    %104 = vmatprep.mubr.f32.mxu0 0.0
    %105 = vmatmul.mubr.f32.gmra.mrb[0].mxu0 %v35
    %v106 = vpop.f32.mrb[0].mxu0
    %v107 = vadd.f32 %v31, %v106
    %v108 = vpop.f32.mrb[0].mxu0
    %109 = vmatprep.mubr.f32.mxu0 0.0
    %110 = vmatmul.mubr.f32.gmra.mrb[0].mxu0 %v38
    %v111 = vpop.f32.mrb[0].mxu0
    %v112 = vadd.f32 %v31, %v111
    %v113 = vpop.f32.mrb[0].mxu0
    %114 = vdwg.mxu0
    %vm115 = vcmask 261120
    %116 = vst.msk [vmem:[#allocation2] sm:$0xff] %vm115, %v107
    %117 = vst.msk [vmem:[#allocation2 + $0x8] sm:$0xff] %vm115, %v112
    // Predicated region
    $region14: #{relfeat_merge_extractor.1} parent=1 // pred_check
      _
    $region15: #{relfeat_merge_extractor.1} parent=1 // pred_check_branch
      %119 = sbr.rel (0) target = $region17
    $region16: #{relfeat_merge_extractor.1} parent=1 // pred_region
      %s121 = ssub.s32 256, 256
      %122 = vsyncadd [#allocation3], %s121
      %s123 = sshll.u32 [#allocation2], 4
      %s124 = int_to_ptr.vmem [resolvable:$true] %s123
      %129 = dma.vmem_to_hbm [thread:$0]  %s124, 256, %s3, [#allocation3], 128, 128, 8
    $region17: #{relfeat_merge_extractor.1} parent=1 // pred_fallthru
      _
    // Predicated region
    $region18: #{relfeat_merge_extractor.1} parent=1 // pred_check
      _
    $region19: #{relfeat_merge_extractor.1} parent=1 // pred_check_branch
      %131 = sbr.rel (0) target = $region21
    $region20: #{relfeat_merge_extractor.1} parent=1 // pred_region
      %132 = dma.done [#allocation3], 256
    $region21: #{relfeat_merge_extractor.1} parent=1 // pred_fallthru
      _
    %133 = vsyncpa [#allocation3], 1

</llo_original>
